<compile_context>
chip_gen: v7x
topology: tpu7x:2x2x1
jax: 0.10.0
libtpu: 0.0.40
codegen_flags: <defaults>
</compile_context>

<pallas_src>
import math

import jax
import jax.numpy as jnp
from jax.experimental import pallas as pl
from jax.experimental.pallas import tpu as pltpu

_LANE = 128  # TPU vreg lane width


def _round_up(a, b):
    return -(-a // b) * b


def _sublane_multiple(dtype) -> int:
    # Native sublane tiling: f32 -> 8, bf16/f16 -> 16, int8/fp8 -> 32.
    itemsize = jnp.dtype(dtype).itemsize
    return 8 * max(1, 4 // max(itemsize, 1))


def _affine_kernel(x_ref, s_ref, b_ref, o_ref):
    """o = x * s + b, computed in f32, cast on store.

    x_ref/o_ref: (TM, L) block.  s_ref/b_ref: (PP, L) resident param plane,
    with TM % PP == 0; row r of the block uses param row r % PP.
    """
    pp, lane = s_ref.shape
    tm = x_ref.shape[0]
    x = x_ref[...].astype(jnp.float32)
    if pp == 1 or pp == tm:
        y = x * s_ref[...] + b_ref[...]
    else:
        # Aligned view (TM//PP, PP, L); broadcast params over the leading dim.
        x3 = x.reshape(tm // pp, pp, lane)
        y = (x3 * s_ref[...][None, :, :] + b_ref[...][None, :, :]).reshape(tm, lane)
    o_ref[...] = y.astype(o_ref.dtype)


def _pallas_affine(x2d, s_tab, b_tab, block_rows, grid_rows):
    rows, lane = x2d.shape
    itemsize = jnp.dtype(x2d.dtype).itemsize
    # Double-buffered input + output blocks + resident params + slack.
    est = (4 * block_rows * lane * itemsize
           + 4 * s_tab.shape[0] * lane * 4
           + (2 << 20))
    vmem_limit = int(min(max(est, 16 << 20), 48 << 20))

    return pl.pallas_call(
        _affine_kernel,
        out_shape=jax.ShapeDtypeStruct((rows, lane), x2d.dtype),
        grid=(grid_rows,),
        in_specs=[
            pl.BlockSpec((block_rows, lane), lambda i: (i, 0)),
            pl.BlockSpec(s_tab.shape, lambda i: (0, 0)),
            pl.BlockSpec(b_tab.shape, lambda i: (0, 0)),
        ],
        out_specs=pl.BlockSpec((block_rows, lane), lambda i: (i, 0)),
        compiler_params=pltpu.CompilerParams(
            dimension_semantics=("parallel",),
            vmem_limit_bytes=vmem_limit,
        ),
    )(x2d, s_tab, b_tab)


def _forward_lane_packed(x, s32, b32, pp, tm_pp):
    """Lane-dense path: flatten row-major, pack 128 elements per vreg row.

    Packed row r, lane j corresponds to component (r*128 + j) % C, so a
    (PP, 128) param table with PP a multiple of P = lcm(C,128)//128 lines up
    for every block whose start row is a multiple of PP.
    """
    n, c = x.shape
    total = n * c
    rows = pl.cdiv(total, _LANE)

    x_flat = x.reshape(-1)
    pad = rows * _LANE - total
    if pad:
        # TODO(synk): the <128-element tail pad + post-slice adds one extra HBM
        # pass; keep N*C % 128 == 0 on the hot path to make in/out zero-copy.
        x_flat = jnp.pad(x_flat, (0, pad))

    # Tiny-input safeguard: never let the block exceed the packed array.
    if rows < pp:
        x_flat = jnp.pad(x_flat, (0, (pp - rows) * _LANE))
        rows = pp

    # >=2 grid steps when possible (v7x megacore + DMA/compute overlap),
    # capped at tm (rounded to a multiple of PP).  No padding to a grid
    # multiple: Pallas clips the ragged final block.
    half = _round_up(pl.cdiv(rows, 2), pp)
    block_rows = max(pp, min(tm_pp, half))
    grid_rows = pl.cdiv(rows, block_rows)

    x_packed = x_flat.reshape(rows, _LANE)

    lane_idx = jnp.arange(pp * _LANE, dtype=jnp.int32) % c
    s_tab = s32[lane_idx].reshape(pp, _LANE)
    b_tab = b32[lane_idx].reshape(pp, _LANE)

    out_packed = _pallas_affine(x_packed, s_tab, b_tab, block_rows, grid_rows)

    out_flat = out_packed.reshape(-1)
    if out_flat.shape[0] != total:
        out_flat = out_flat[:total]
    return out_flat.reshape(n, c)


def _forward_row_tiled(x, s32, b32, sub, tm):
    """Fallback for very large C: tile over rows, keep full C width per block."""
    n, c = x.shape

    xp, n_eff = x, n
    if n < sub:
        xp = jnp.pad(x, ((0, sub - n), (0, 0)))
        n_eff = sub

    tm_r = max(sub, (tm // sub) * sub)
    half = _round_up(pl.cdiv(n_eff, 2), sub)
    block_n = max(sub, min(tm_r, half))
    grid_n = pl.cdiv(n_eff, block_n)

    s2 = s32.reshape(1, c)
    b2 = b32.reshape(1, c)

    out = _pallas_affine(xp, s2, b2, block_n, grid_n)
    return out[:n] if n_eff != n else out


def linefitter_forward(x, slopes, intercepts, *, tm=4096):
    """Pallas implementation of LineFitter.forward.

    x:          [N, C] float (f32 / bf16 / ...)
    slopes:     [C]
    intercepts: [C]
    returns     [N, C] (same dtype as x; math done in f32 inside the kernel)

    tm = target rows per packed (rows, 128) block; rounded internally to the
    param-table period and the dtype's sublane granularity.  Default 4096
    (2 MiB f32 block, ~8 MiB VMEM double-buffered: fits v5e/v6e/v7x).
    """
    n, c = x.shape
    assert tm >= 8
    s32 = jnp.asarray(slopes, jnp.float32).reshape(-1)
    b32 = jnp.asarray(intercepts, jnp.float32).reshape(-1)
    assert s32.shape == (c,) and b32.shape == (c,)

    sub = _sublane_multiple(x.dtype)
    p = math.lcm(c, _LANE) // _LANE          # param pattern period (packed rows)
    pp = math.lcm(p, sub)                    # sublane-aligned period
    tm_pp = max(pp, (tm // pp) * pp)

    if pp <= min(tm_pp, 2048):
        return _forward_lane_packed(x, s32, b32, pp, tm_pp)
    return _forward_row_tiled(x, s32, b32, sub, tm)


def linefitter_fit(f, y, eps=1e-12):
    """Plain-JAX glue mirroring LineFitter.fit (parameter setup, not hot path).

    Per component i, least-squares fit f[:, i] ~= slope * y[:, i] + intercept
    (closed-form normal equations of torch.linalg.lstsq([y, 1], f)).  Note the
    eps guard slightly biases slopes for near-constant-y columns vs true lstsq.
    Also returns R^2, matching the module's self.rsquared.
    """
    y_mean = jnp.mean(y, axis=0)
    f_mean = jnp.mean(f, axis=0)
    cov = jnp.mean((y - y_mean) * (f - f_mean), axis=0)
    var = jnp.mean((y - y_mean) ** 2, axis=0)
    slopes = cov / (var + eps)
    intercepts = f_mean - slopes * y_mean
    f_pred = y * slopes + intercepts
    ss_total = jnp.sum((f - f_mean) ** 2, axis=0)
    ss_resid = jnp.sum((f - f_pred) ** 2, axis=0)
    r_squared = 1.0 - ss_resid / (ss_total + eps)
    return slopes, intercepts, r_squared


if __name__ == "__main__":
    key = jax.random.PRNGKey(0)
    k1, k2, k3, k4, k5 = jax.random.split(key, 5)

    N, C = 512, 4  # batch rows, number of components

    # --- fit (parameter setup) on synthetic near-linear data ---
    y_fit = jax.random.normal(k1, (N, C), dtype=jnp.float32)
    true_s = jnp.array([0.5, -1.25, 2.0, 0.1], dtype=jnp.float32)
    true_b = jnp.array([0.3, 1.0, -0.7, 0.05], dtype=jnp.float32)
    f_fit = (y_fit * true_s + true_b
             + 0.01 * jax.random.normal(k2, (N, C), dtype=jnp.float32))
    slopes, intercepts, r2 = linefitter_fit(f_fit, y_fit)

    # --- forward: f32, C divides 128, N*C % 128 == 0 (zero-copy pack) ---
    x = jax.random.normal(k3, (N, C), dtype=jnp.float32)
    ref = x * slopes.reshape(1, C) + intercepts.reshape(1, C)
    out = jax.block_until_ready(linefitter_forward(x, slopes, intercepts))
    assert out.shape == (N, C)
    assert jnp.allclose(out, ref, atol=1e-6, rtol=1e-6)

    # Small tm override (still >=2 grid steps).
    out2 = jax.block_until_ready(linefitter_forward(x, slopes, intercepts, tm=8))
    assert jnp.allclose(out2, ref, atol=1e-6, rtol=1e-6)

    # Larger N so block_rows > PP (exercises the in-kernel param broadcast).
    xl = jax.random.normal(k4, (2048, C), dtype=jnp.float32)
    refl = xl * slopes.reshape(1, C) + intercepts.reshape(1, C)
    outl = jax.block_until_ready(linefitter_forward(xl, slopes, intercepts))
    assert jnp.allclose(outl, refl, atol=1e-6, rtol=1e-6)

    # Non-divisor C (128 % 6 != 0) with a ragged tail: generalized lane-packed
    # path with a (24, 128) param table and a clipped final block.
    C2 = 6
    x6 = jax.random.normal(k5, (1000, C2), dtype=jnp.float32)
    s6 = jnp.linspace(-1.0, 2.0, C2, dtype=jnp.float32)
    b6 = jnp.linspace(0.5, -0.5, C2, dtype=jnp.float32)
    ref6 = x6 * s6.reshape(1, C2) + b6.reshape(1, C2)
    out6 = jax.block_until_ready(linefitter_forward(x6, s6, b6))
    assert jnp.allclose(out6, ref6, atol=1e-6, rtol=1e-6)

    # bf16 input: f32 compute inside the kernel, cast on store.
    xb = x.astype(jnp.bfloat16)
    refb = (xb.astype(jnp.float32) * slopes.reshape(1, C)
            + intercepts.reshape(1, C)).astype(jnp.bfloat16)
    outb = jax.block_until_ready(linefitter_forward(xb, slopes, intercepts))
    assert outb.dtype == jnp.bfloat16
    assert jnp.allclose(outb.astype(jnp.float32), refb.astype(jnp.float32),
                        atol=3e-2, rtol=3e-2)

    print("KERNEL_OK")
</pallas_src>

<mosaic_0001>
module attributes {stable_mosaic.version = 11 : i64} {
  func.func @_affine_kernel(%arg0: i32, %arg1: memref<8x128xf32, #tpu.memory_space<vmem>>, %arg2: memref<8x128xf32, #tpu.memory_space<vmem>>, %arg3: memref<8x128xf32, #tpu.memory_space<vmem>>, %arg4: memref<8x128xf32, #tpu.memory_space<vmem>>) attributes {dimension_semantics = [#tpu.dimension_semantics<parallel>], iteration_bounds = array<i64: 2>, scalar_prefetch = 0 : i64, scratch_operands = 0 : i64, tpu.core_type = #tpu.core_type<tc>, window_params = [{transform_indices = @transform_0, window_bounds = array<i64: 8, 128>}, {pipeline_mode = #tpu.pipeline_mode<synchronous>, transform_indices = @transform_1, window_bounds = array<i64: 8, 128>}, {pipeline_mode = #tpu.pipeline_mode<synchronous>, transform_indices = @transform_2, window_bounds = array<i64: 8, 128>}, {transform_indices = @transform_3, window_bounds = array<i64: 8, 128>}]} {
    %c0 = arith.constant 0 : index
    %c0_0 = arith.constant 0 : index
    %0 = vector.load %arg1[%c0, %c0_0] : memref<8x128xf32, #tpu.memory_space<vmem>>, vector<8x128xf32>
    %c0_1 = arith.constant 0 : index
    %c0_2 = arith.constant 0 : index
    %1 = vector.load %arg2[%c0_1, %c0_2] : memref<8x128xf32, #tpu.memory_space<vmem>>, vector<8x128xf32>
    %2 = arith.mulf %0, %1 : vector<8x128xf32>
    %c0_3 = arith.constant 0 : index
    %c0_4 = arith.constant 0 : index
    %3 = vector.load %arg3[%c0_3, %c0_4] : memref<8x128xf32, #tpu.memory_space<vmem>>, vector<8x128xf32>
    %4 = arith.addf %2, %3 : vector<8x128xf32>
    %c0_5 = arith.constant 0 : index
    %c0_6 = arith.constant 0 : index
    %5 = vector.load %arg4[%c0_5, %c0_6] : memref<8x128xf32, #tpu.memory_space<vmem>>, vector<8x128xf32>
    tpu.vector_store %arg4[%c0_5, %c0_6], %4 {strides = array<i32>} : memref<8x128xf32, #tpu.memory_space<vmem>>, vector<8x128xf32>,
    return
  }
  func.func @transform_0(%arg0: i32) -> (i32, i32) {
    %c0_i32 = arith.constant 0 : i32
    %c0_i32_0 = arith.constant 0 : i32
    return %arg0, %c0_i32 : i32, i32
  }
  func.func @transform_1(%arg0: i32) -> (i32, i32) {
    %c0_i32 = arith.constant 0 : i32
    %c0_i32_0 = arith.constant 0 : i32
    %c0_i32_1 = arith.constant 0 : i32
    return %c0_i32, %c0_i32_0 : i32, i32
  }
  func.func @transform_2(%arg0: i32) -> (i32, i32) {
    %c0_i32 = arith.constant 0 : i32
    %c0_i32_0 = arith.constant 0 : i32
    %c0_i32_1 = arith.constant 0 : i32
    return %c0_i32, %c0_i32_0 : i32, i32
  }
  func.func @transform_3(%arg0: i32) -> (i32, i32) {
    %c0_i32 = arith.constant 0 : i32
    %c0_i32_0 = arith.constant 0 : i32
    return %arg0, %c0_i32 : i32, i32
  }
}

</mosaic_0001>

<llo_original>
// kernel: tpu_custom_call.1
$region0: #{tpu_custom_call.1}
  #allocation0 [shape = 'u32[]', space=smem, size = 0x4, offset = 0x4, fixed_abs, tag = 'smem constant byte address 0x4 - core index']
  #allocation1 [shape = 'u32[144,128]{1,0:T(1,128)}', space=vmem, size = 0x12000, scoped, tag = 'internal scratch']
  %s0 = inlined_call_operand.hbm [shape: f32[16,128], index: 0, kind: input, shape index: {}]
  %s1 = inlined_call_operand.hbm [shape: f32[8,128], index: 1, kind: input, shape index: {}]
  %s2 = inlined_call_operand.hbm [shape: f32[8,128], index: 2, kind: input, shape index: {}]
  %s3 = inlined_call_operand.hbm [shape: f32[16,128], index: 3, kind: output, shape index: {}]
  %s4 = sld [smem:[#allocation0]]
  $region57: #{tpu_custom_call.1} parent=0
    _
  %s6 = ssub.s32 1, %s4
  %s7 = scalar_select 0, %s6, %s4
  $region1: #{tpu_custom_call.1} parent=0
    #allocation2 [shape = 'u8[8192]{0}', space=vmem, size = 0x2000, scoped, tag = 'input window, operand 0']
    #allocation3 [shape = 's32[2]{0}', space=sflag, size = 0x8, scoped, tag = 'scoped memory for tpu_custom_call.1']
    #allocation4 [shape = 's32[2]{0}', space=sflag, size = 0x8, scoped, tag = 'scoped memory for tpu_custom_call.1']
    #allocation5 [shape = 'u8[4096]{0}', space=vmem, size = 0x1000, scoped, tag = 'input window, operand 1, single buffered']
    #allocation6 [shape = 's32[1]{0}', space=sflag, size = 0x4, scoped, tag = 'scoped memory for tpu_custom_call.1']
    #allocation7 [shape = 'u8[4096]{0}', space=vmem, size = 0x1000, scoped, tag = 'input window, operand 2, single buffered']
    #allocation8 [shape = 'u8[8192]{0}', space=vmem, size = 0x2000, scoped, tag = 'output window, operand 0']
    %8 = vsyncpa [#allocation3], 0
    %s9 = scalar_lea.sflag [#allocation3], 1
    %10 = vsyncpa %s9, 0
    %11 = vsyncpa [#allocation6], 0
    %12 = vsyncpa [#allocation4], 0
    %s13 = scalar_lea.sflag [#allocation4], 1
    %14 = vsyncpa %s13, 0
    loop: start=0, step=1, limit=4
    $region2: #{tpu_custom_call.1} parent=1 // loop_pre_header
      _
    $region3: #{tpu_custom_call.1} parent=1 // loop_header
      %s16 = sphi 0, %s20
      %p17 = scmp.ge.s32.totalorder %s16, 4
      %s26 = sphi 0, %s28
      %s29 = sphi 0, %s26
      %s30 = sphi 0, %s29
      %s46 = sphi 0, %s30
      %s50 = sphi 0, %s50
      %s52 = sphi 0, %s50
      %s53 = sphi 0, %s52
      %s67 = sphi 0, %s53
      %s71 = sphi 0, %s71
      %s73 = sphi 0, %s71
      %s74 = sphi 0, %s73
      %s88 = sphi 0, %s74
      %s94 = sphi 0, %s96
      %s97 = sphi 0, %s94
      %s98 = sphi 0, %s97
      %s114 = sphi 0, %s98
    $region4: #{tpu_custom_call.1} parent=1 // loop_header_branch
      %19 = sbr.rel (%p17) target = $region8
    $region5: #{tpu_custom_call.1} parent=1 // loop_body
      %s21 = ssub.s32 %s16, 1
      %s22 = ssub.s32 %s16, 2
      %s23 = sadd.s32 %s16, 1
      %s24 = ssub.s32 %s16, %s23
      %p25 = scmp.eq.s32.totalorder %s24, 0
      %s27 = sadd.s32 %s26, 1
      %s28 = scalar_select %p25, %s26, %s27
      %p31 = pneg %p25
      %p32 = scmp.eq.s32.totalorder %s16, 1
      %p33 = por %p31, %p32
      %p34 = scmp.ne.s32.totalorder %s26, %s29
      %p35 = scmp.eq.s32.totalorder %s16, 0
      %p36 = por %p34, %p35
      %p37 = scmp.ne.s32.totalorder %s26, %s29
      %p38 = scmp.eq.s32.totalorder %s21, 1
      %p39 = por %p37, %p38
      %p40 = scmp.ne.s32.totalorder %s29, %s30
      %p41 = scmp.eq.s32.totalorder %s21, 0
      %p42 = por %p40, %p41
      %p43 = scmp.ne.s32.totalorder %s29, %s30
      %p44 = scmp.eq.s32.totalorder %s22, 1
      %p45 = por %p43, %p44
      %p47 = scmp.ne.s32.totalorder %s30, %s46
      %p48 = scmp.eq.s32.totalorder %s22, 0
      %p49 = por %p47, %p48
      %s51 = sadd.s32 %s50, 1
      %p54 = scmp.eq.s32.totalorder %s16, 1
      %p55 = scmp.ne.s32.totalorder %s50, %s52
      %p56 = scmp.eq.s32.totalorder %s16, 0
      %p57 = por %p55, %p56
      %p58 = scmp.ne.s32.totalorder %s50, %s52
      %p59 = scmp.eq.s32.totalorder %s21, 1
      %p60 = por %p58, %p59
      %p61 = scmp.ne.s32.totalorder %s52, %s53
      %p62 = scmp.eq.s32.totalorder %s21, 0
      %p63 = por %p61, %p62
      %p64 = scmp.ne.s32.totalorder %s52, %s53
      %p65 = scmp.eq.s32.totalorder %s22, 1
      %p66 = por %p64, %p65
      %p68 = scmp.ne.s32.totalorder %s53, %s67
      %p69 = scmp.eq.s32.totalorder %s22, 0
      %p70 = por %p68, %p69
      %s72 = sadd.s32 %s71, 1
      %p75 = scmp.eq.s32.totalorder %s16, 1
      %p76 = scmp.ne.s32.totalorder %s71, %s73
      %p77 = scmp.eq.s32.totalorder %s16, 0
      %p78 = por %p76, %p77
      %p79 = scmp.ne.s32.totalorder %s71, %s73
      %p80 = scmp.eq.s32.totalorder %s21, 1
      %p81 = por %p79, %p80
      %p82 = scmp.ne.s32.totalorder %s73, %s74
      %p83 = scmp.eq.s32.totalorder %s21, 0
      %p84 = por %p82, %p83
      %p85 = scmp.ne.s32.totalorder %s73, %s74
      %p86 = scmp.eq.s32.totalorder %s22, 1
      %p87 = por %p85, %p86
      %p89 = scmp.ne.s32.totalorder %s74, %s88
      %p90 = scmp.eq.s32.totalorder %s22, 0
      %p91 = por %p89, %p90
      %s92 = ssub.s32 %s16, %s23
      %p93 = scmp.eq.s32.totalorder %s92, 0
      %s95 = sadd.s32 %s94, 1
      %s96 = scalar_select %p93, %s94, %s95
      %p99 = pneg %p93
      %p100 = scmp.eq.s32.totalorder %s16, 1
      %p101 = por %p99, %p100
      %p102 = scmp.ne.s32.totalorder %s94, %s97
      %p103 = scmp.eq.s32.totalorder %s16, 0
      %p104 = por %p102, %p103
      %p105 = scmp.ne.s32.totalorder %s94, %s97
      %p106 = scmp.eq.s32.totalorder %s21, 1
      %p107 = por %p105, %p106
      %p108 = scmp.ne.s32.totalorder %s97, %s98
      %p109 = scmp.eq.s32.totalorder %s21, 0
      %p110 = por %p108, %p109
      %p111 = scmp.ne.s32.totalorder %s97, %s98
      %p112 = scmp.eq.s32.totalorder %s22, 1
      %p113 = por %p111, %p112
      %p115 = scmp.ne.s32.totalorder %s98, %s114
      %p116 = scmp.eq.s32.totalorder %s22, 0
      %p117 = por %p115, %p116
      %p118 = scmp.le.s32.totalorder 1, %s16
      %p119 = scmp.lt.s32.totalorder %s16, 3
      %p120 = pnand %p118, %p119
      %p121 = pneg %p120
      // Predicated region
      $region9: #{tpu_custom_call.1} parent=5 // pred_check
        _
      $region10: #{tpu_custom_call.1} parent=5 // pred_check_branch
        %123 = sbr.rel (%p120) target = $region12
      $region11: #{tpu_custom_call.1} parent=5 // pred_region
        %s124 = ssub.s32 %s16, 1
        // Predicated region
        $region13: #{tpu_custom_call.1} parent=11 // pred_check
          %p125 = pneg %p63
        $region14: #{tpu_custom_call.1} parent=11 // pred_check_branch
          %127 = sbr.rel (%p125) target = $region16
        $region15: #{tpu_custom_call.1} parent=11 // pred_region
          %s129 = ssub.s32 128, 128
          %130 = vsyncadd [#allocation6], %s129
          %s132 = sshll.u32 [#allocation5], 4
          %s133 = int_to_ptr.vmem [resolvable:$true] %s132
          %135 = dma.hbm_to_vmem [thread:$0]  %s1, 128, %s133, [#allocation6]
        $region16: #{tpu_custom_call.1} parent=11 // pred_fallthru
          _
        // Predicated region
        $region17: #{tpu_custom_call.1} parent=11 // pred_check
          %p136 = pneg %p84
        $region18: #{tpu_custom_call.1} parent=11 // pred_check_branch
          %138 = sbr.rel (%p136) target = $region20
        $region19: #{tpu_custom_call.1} parent=11 // pred_region
          %s140 = ssub.s32 128, 128
          %141 = vsyncadd [#allocation6], %s140
          %s143 = sshll.u32 [#allocation7], 4
          %s144 = int_to_ptr.vmem [resolvable:$true] %s143
          %146 = dma.hbm_to_vmem [thread:$0]  %s2, 128, %s144, [#allocation6]
        $region20: #{tpu_custom_call.1} parent=11 // pred_fallthru
          _
      $region12: #{tpu_custom_call.1} parent=5 // pred_fallthru
        _
      %p147 = scmp.lt.s32.totalorder %s16, 2
      // Predicated region
      $region21: #{tpu_custom_call.1} parent=5 // pred_check
        %p148 = pneg %p147
      $region22: #{tpu_custom_call.1} parent=5 // pred_check_branch
        %150 = sbr.rel (%p148) target = $region24
      $region23: #{tpu_custom_call.1} parent=5 // pred_region
        // Predicated region
        $region25: #{tpu_custom_call.1} parent=23 // pred_check
          %p151 = pneg %p36
        $region26: #{tpu_custom_call.1} parent=23 // pred_check_branch
          %153 = sbr.rel (%p151) target = $region28
        $region27: #{tpu_custom_call.1} parent=23 // pred_region
          %s154 = sand.u32 %s26, 1
          %s155 = scalar_lea.sflag [#allocation3], %s154
          %s156 = sand.u32 %s26, 1
          %s157 = smul.addr %s156, 8
          %s158 = scalar_lea.vmem [#allocation2], %s157
          %s160 = ssub.s32 128, 128
          %161 = vsyncadd %s155, %s160
          %s162 = smul.addr %s16, 128
          %s163 = scalar_lea.hbm %s0, %s162
          %s165 = sshll.u32 %s158, 4
          %s166 = int_to_ptr.vmem [resolvable:$true] %s165
          %168 = dma.hbm_to_vmem [thread:$0]  %s163, 128, %s166, %s155
        $region28: #{tpu_custom_call.1} parent=23 // pred_fallthru
          _
      $region24: #{tpu_custom_call.1} parent=5 // pred_fallthru
        _
      %p169 = scmp.le.s32.totalorder 1, %s16
      %p170 = scmp.lt.s32.totalorder %s16, 3
      %p171 = pnand %p169, %p170
      %p172 = pneg %p171
      // Predicated region
      $region29: #{tpu_custom_call.1} parent=5 // pred_check
        _
      $region30: #{tpu_custom_call.1} parent=5 // pred_check_branch
        %174 = sbr.rel (%p171) target = $region32
      $region31: #{tpu_custom_call.1} parent=5 // pred_region
        %s175 = ssub.s32 %s16, 1
        %s176 = sand.u32 %s29, 1
        %s177 = scalar_lea.sflag [#allocation3], %s176
        %s178 = sand.u32 %s29, 1
        %s179 = smul.addr %s178, 8
        %s180 = scalar_lea.vmem [#allocation2], %s179
        // Predicated region
        $region33: #{tpu_custom_call.1} parent=31 // pred_check
          %p181 = pneg %p42
        $region34: #{tpu_custom_call.1} parent=31 // pred_check_branch
          %183 = sbr.rel (%p181) target = $region36
        $region35: #{tpu_custom_call.1} parent=31 // pred_region
          %184 = dma.done %s177, 128
        $region36: #{tpu_custom_call.1} parent=31 // pred_fallthru
          _
        // Predicated region
        $region37: #{tpu_custom_call.1} parent=31 // pred_check
          %p185 = pneg %p63
        $region38: #{tpu_custom_call.1} parent=31 // pred_check_branch
          %187 = sbr.rel (%p185) target = $region40
        $region39: #{tpu_custom_call.1} parent=31 // pred_region
          %188 = dma.done [#allocation6], 128
        $region40: #{tpu_custom_call.1} parent=31 // pred_fallthru
          _
        // Predicated region
        $region41: #{tpu_custom_call.1} parent=31 // pred_check
          %p189 = pneg %p84
        $region42: #{tpu_custom_call.1} parent=31 // pred_check_branch
          %191 = sbr.rel (%p189) target = $region44
        $region43: #{tpu_custom_call.1} parent=31 // pred_region
          %192 = dma.done [#allocation6], 128
        $region44: #{tpu_custom_call.1} parent=31 // pred_fallthru
          _
        %s193 = sand.u32 %s29, 1
        %s194 = scalar_lea.sflag [#allocation3], %s193
        %s195 = sand.u32 %s29, 1
        %s196 = smul.addr %s195, 8
        %s197 = scalar_lea.vmem [#allocation2], %s196
        %p198 = pneg %p42
        %p199 = pneg %p39
        %p200 = pneg %p63
        %p201 = pneg %p60
        %p202 = pneg %p84
        %p203 = pneg %p81
        %p204 = pneg %p110
        %p205 = pneg %p107
        %s206 = sand.u32 %s97, 1
        %s207 = scalar_lea.sflag [#allocation4], %s206
        %s208 = sand.u32 %s97, 1
        %s209 = smul.addr %s208, 8
        %s210 = scalar_lea.vmem [#allocation8], %s209
        %v211 = vld [vmem:[%s180] sm:$0xff]
        %v212 = vld [vmem:[#allocation5] sm:$0xff]
        %v213 = vmul.f32 %v211, %v212
        %v214 = vld [vmem:[#allocation7] sm:$0xff]
        %v215 = vadd.f32 %v213, %v214
        %216 = vst [vmem:[%s210] sm:$0xff] %v215
        %s217 = sand.u32 %s97, 1
        %s218 = scalar_lea.sflag [#allocation4], %s217
        %s219 = sand.u32 %s97, 1
        %s220 = smul.addr %s219, 8
        %s221 = scalar_lea.vmem [#allocation8], %s220
        // Predicated region
        $region45: #{tpu_custom_call.1} parent=31 // pred_check
          %p222 = pneg %p107
        $region46: #{tpu_custom_call.1} parent=31 // pred_check_branch
          %224 = sbr.rel (%p222) target = $region48
        $region47: #{tpu_custom_call.1} parent=31 // pred_region
          %s226 = ssub.s32 128, 128
          %227 = vsyncadd %s218, %s226
          %s228 = smul.addr %s21, 128
          %s229 = scalar_lea.hbm %s3, %s228
          %s231 = sshll.u32 %s221, 4
          %s232 = int_to_ptr.vmem [resolvable:$true] %s231
          %234 = dma.vmem_to_hbm [thread:$0]  %s232, 128, %s229, %s218
        $region48: #{tpu_custom_call.1} parent=31 // pred_fallthru
          _
      $region32: #{tpu_custom_call.1} parent=5 // pred_fallthru
        _
      %p235 = scmp.le.s32.totalorder 2, %s16
      // Predicated region
      $region49: #{tpu_custom_call.1} parent=5 // pred_check
        %p236 = pneg %p235
      $region50: #{tpu_custom_call.1} parent=5 // pred_check_branch
        %238 = sbr.rel (%p236) target = $region52
      $region51: #{tpu_custom_call.1} parent=5 // pred_region
        %s239 = ssub.s32 %s16, 2
        // Predicated region
        $region53: #{tpu_custom_call.1} parent=51 // pred_check
          %p240 = pneg %p113
        $region54: #{tpu_custom_call.1} parent=51 // pred_check_branch
          %242 = sbr.rel (%p240) target = $region56
        $region55: #{tpu_custom_call.1} parent=51 // pred_region
          %s243 = sand.u32 %s98, 1
          %s244 = scalar_lea.sflag [#allocation4], %s243
          %s245 = sand.u32 %s98, 1
          %s246 = smul.addr %s245, 8
          %s247 = scalar_lea.vmem [#allocation8], %s246
          %248 = dma.done %s244, 128
        $region56: #{tpu_custom_call.1} parent=51 // pred_fallthru
          _
      $region52: #{tpu_custom_call.1} parent=5 // pred_fallthru
        _
    $region6: #{tpu_custom_call.1} parent=1 // loop_footer
      %s20 = sadd.s32 1, %s16
    $region7: #{tpu_custom_call.1} parent=1 // loop_footer_branch
      %15 = sbr.rel target = $region3
    $region8: #{tpu_custom_call.1} parent=1 // loop_exit
      _
    %249 = vsyncpa [#allocation3], 1
    %s250 = scalar_lea.sflag [#allocation3], 1
    %251 = vsyncpa %s250, 1
    %252 = vsyncpa [#allocation6], 1
    %253 = vsyncpa [#allocation4], 1
    %s254 = scalar_lea.sflag [#allocation4], 1
    %255 = vsyncpa %s254, 1

</llo_original>
